<compile_context>
chip_gen: v7x
topology: tpu7x:2x2x1
jax: 0.10.0
libtpu: 0.0.40
codegen_flags: <defaults>
</compile_context>

<pallas_src>
import functools

import jax
import jax.numpy as jnp
from jax.experimental import pallas as pl
from jax.experimental.pallas import tpu as pltpu

TF_EPS = 1e-12
_LANE = 128
_SUBLANE = 8


def _round_up(value, multiple):
    return ((value + multiple - 1) // multiple) * multiple


def _highway_kernel(x_ref, w_ref, p_ref, out_ref, state_ref, *, real_width,
                    lanes_padded):
    """One (batch_tile, layer) grid step; highway state carried in VMEM scratch."""
    width_pad = x_ref.shape[-1]
    layer = pl.program_id(1)

    @pl.when(layer == 0)
    def _():
        state_ref[...] = x_ref[...].astype(jnp.float32)

    h = state_ref[...]
    w = w_ref[0]            # (Wp, 2*Wp) fused [gate | transfer] weights (bf16)
    params = p_ref[0]       # (4, Wp) f32 rows = [bg + gate_bias, bt, gamma, beta]
    bg = params[0:1, :]
    bt = params[1:2, :]
    gamma = params[2:3, :]
    beta = params[3:4, :]

    # Single fused MXU matmul -> (B, 2*Wp) in f32.
    fused = jnp.dot(h.astype(w.dtype), w, preferred_element_type=jnp.float32)
    sig = jax.nn.sigmoid(fused[:, :width_pad] + bg)          # gate_bias folded into bg
    transfer = jnp.maximum(fused[:, width_pad:] + bt, 0.0)   # ReLU transfer function
    raw = h + sig * (transfer - h)                           # 3-op highway combine

    # LayerNorm over the real feature width (padded lanes of raw are exactly 0).
    inv_width = 1.0 / float(real_width)
    mean = jnp.sum(raw, axis=-1, keepdims=True) * inv_width
    centered = raw - mean
    if lanes_padded:
        lane = jax.lax.broadcasted_iota(jnp.int32, (1, width_pad), 1)
        cm = centered * (lane < real_width).astype(jnp.float32)
    else:
        cm = centered
    var = jnp.sum(cm * cm, axis=-1, keepdims=True) * inv_width
    y = centered * jax.lax.rsqrt(var + TF_EPS) * gamma + beta   # pads stay 0
    state_ref[...] = y

    @pl.when(layer == pl.num_programs(1) - 1)
    def _():
        out_ref[...] = y.astype(out_ref.dtype)


def highway_norm_forward(x, wg, bg, wt, bt, gamma, beta, *, gate_bias,
                         weight_dtype=jnp.bfloat16, batch_tile=None):
    """HighwayNormLayer forward (eval mode).

    x: (B, W).  wg/wt: (L, W, W) in (in, out) layout (= torch linear.weight.T).
    bg/bt/gamma/beta: (L, 1, W).
    """
    batch, width = x.shape
    num_layers = wg.shape[0]

    width_pad = _round_up(max(width, _LANE), _LANE)
    batch_pad = _round_up(max(batch, _SUBLANE), _SUBLANE)

    # ---- batch tiling: bounded tiles, batch padded to a clean multiple -------
    if batch_tile is None:
        tile_cap = 128 if width_pad >= 2048 else 256      # shrink tiles for wide layers
        batch_tile = batch_pad if batch_pad <= tile_cap else tile_cap
    batch_tile = _round_up(min(batch_tile, batch_pad), _SUBLANE)
    batch_pad = _round_up(batch_pad, batch_tile)
    num_batch_tiles = batch_pad // batch_tile

    # ---- wrapper-side layout: fuse gate/transfer weights, pack small params --
    w_fused = jnp.zeros((num_layers, width_pad, 2 * width_pad), dtype=weight_dtype)
    w_fused = w_fused.at[:, :width, :width].set(wg.astype(weight_dtype))
    w_fused = w_fused.at[:, :width, width_pad:width_pad + width].set(
        wt.astype(weight_dtype))

    params = jnp.zeros((num_layers, 4, width_pad), dtype=jnp.float32)
    params = params.at[:, 0, :width].set(
        bg[:, 0, :].astype(jnp.float32) + jnp.float32(gate_bias))   # fold gate bias
    params = params.at[:, 1, :width].set(bt[:, 0, :].astype(jnp.float32))
    params = params.at[:, 2, :width].set(gamma[:, 0, :].astype(jnp.float32))
    params = params.at[:, 3, :width].set(beta[:, 0, :].astype(jnp.float32))

    x_pad = jnp.zeros((batch_pad, width_pad), dtype=x.dtype).at[:batch, :width].set(x)

    kernel = functools.partial(_highway_kernel, real_width=width,
                               lanes_padded=(width != width_pad))

    grid_spec = pltpu.PrefetchScalarGridSpec(
        num_scalar_prefetch=0,
        grid=(num_batch_tiles, num_layers),
        in_specs=[
            pl.BlockSpec((batch_tile, width_pad), lambda b, l: (b, 0)),
            pl.BlockSpec((1, width_pad, 2 * width_pad), lambda b, l: (l, 0, 0)),
            pl.BlockSpec((1, 4, width_pad), lambda b, l: (l, 0, 0)),
        ],
        out_specs=pl.BlockSpec((batch_tile, width_pad), lambda b, l: (b, 0)),
        scratch_shapes=[pltpu.VMEM((batch_tile, width_pad), jnp.float32)],
    )

    # ---- VMEM budget: double-buffered DMA blocks + live f32 intermediates ----
    w_itemsize = jnp.dtype(weight_dtype).itemsize
    x_itemsize = jnp.dtype(x.dtype).itemsize
    per_buf = (width_pad * 2 * width_pad * w_itemsize        # fused weight block
               + 4 * width_pad * 4                           # packed params block
               + 2 * batch_tile * width_pad * x_itemsize)    # x tile + out tile
    live_f32 = (batch_tile * width_pad * 4                   # state scratch
                + batch_tile * 2 * width_pad * 4             # fused matmul result
                + 4 * batch_tile * width_pad * 4)            # sig/transfer/raw/centered
    vmem_needed = 2 * per_buf + live_f32
    vmem_limit = int(min(56 * 1024 * 1024,                   # headroom on v7x's 64 MiB
                         max(32 * 1024 * 1024, vmem_needed + (2 << 20))))

    out_pad = pl.pallas_call(
        kernel,
        out_shape=jax.ShapeDtypeStruct((batch_pad, width_pad), x.dtype),
        grid_spec=grid_spec,
        compiler_params=pltpu.CompilerParams(
            dimension_semantics=("parallel", "arbitrary"),
            vmem_limit_bytes=vmem_limit),
    )(x_pad, w_fused, params)

    return out_pad[:batch, :width]


def _reference(x, wg, bg, wt, bt, gamma, beta, gate_bias, dot_dtype=jnp.float32):
    """Pure-JAX reference; dot_dtype lets it mimic the bf16 weight streaming."""
    h = x.astype(jnp.float32)
    for i in range(wg.shape[0]):
        hd = h.astype(dot_dtype)
        g = jnp.dot(hd, wg[i].astype(dot_dtype),
                    preferred_element_type=jnp.float32) + bg[i, 0]
        t = jnp.dot(hd, wt[i].astype(dot_dtype),
                    preferred_element_type=jnp.float32) + bt[i, 0]
        s = jax.nn.sigmoid(g + gate_bias)
        raw = s * jnp.maximum(t, 0.0) + (1.0 - s) * h
        mean = jnp.mean(raw, axis=-1, keepdims=True)
        var = jnp.mean((raw - mean) ** 2, axis=-1, keepdims=True)
        h = (raw - mean) / jnp.sqrt(var + TF_EPS) * gamma[i, 0] + beta[i, 0]
    return h


def _make_params(key, num_layers, width):
    kwg, kbg, kwt, kbt = jax.random.split(key, 4)
    scale = 1.0 / jnp.sqrt(width)
    wg = jax.random.uniform(kwg, (num_layers, width, width),
                            minval=-scale, maxval=scale, dtype=jnp.float32)
    wt = jax.random.uniform(kwt, (num_layers, width, width),
                            minval=-scale, maxval=scale, dtype=jnp.float32)
    bg = jax.random.uniform(kbg, (num_layers, 1, width),
                            minval=-scale, maxval=scale, dtype=jnp.float32)
    bt = jax.random.uniform(kbt, (num_layers, 1, width),
                            minval=-scale, maxval=scale, dtype=jnp.float32)
    gamma = jnp.ones((num_layers, 1, width), dtype=jnp.float32)
    beta = jnp.zeros((num_layers, 1, width), dtype=jnp.float32)
    return wg, bg, wt, bt, gamma, beta


if __name__ == "__main__":
    key = jax.random.PRNGKey(0)
    kx1, kp1, kx2, kp2 = jax.random.split(key, 4)

    # Config 1: width not a multiple of 128 (masked-LN path), single batch tile.
    num_layers, width, batch, gate_bias = 3, 32, 8, -1.0
    x = jax.random.normal(kx1, (batch, width), dtype=jnp.float32)
    wg, bg, wt, bt, gamma, beta = _make_params(kp1, num_layers, width)

    out = jax.block_until_ready(
        highway_norm_forward(x, wg, bg, wt, bt, gamma, beta, gate_bias=gate_bias))
    ref_bf16 = _reference(x, wg, bg, wt, bt, gamma, beta, gate_bias,
                          dot_dtype=jnp.bfloat16)
    ref_f32 = _reference(x, wg, bg, wt, bt, gamma, beta, gate_bias,
                         dot_dtype=jnp.float32)
    assert out.shape == (batch, width)
    assert jnp.allclose(out, ref_bf16, atol=2e-3, rtol=2e-3), \
        "config1 mismatch vs bf16 reference"
    assert jnp.allclose(out, ref_f32, atol=5e-2, rtol=5e-2), \
        "config1 drifted from f32 reference"

    # Config 2: width == 128 (mask-free path), forced small batch tile so the
    # parallel batch-tile grid axis is exercised (2 tiles).
    num_layers2, width2, batch2, gate_bias2 = 2, 128, 16, -2.0
    x2 = jax.random.normal(kx2, (batch2, width2), dtype=jnp.float32)
    wg2, bg2, wt2, bt2, gamma2, beta2 = _make_params(kp2, num_layers2, width2)

    out2 = jax.block_until_ready(
        highway_norm_forward(x2, wg2, bg2, wt2, bt2, gamma2, beta2,
                             gate_bias=gate_bias2, batch_tile=8))
    ref2_bf16 = _reference(x2, wg2, bg2, wt2, bt2, gamma2, beta2, gate_bias2,
                           dot_dtype=jnp.bfloat16)
    assert out2.shape == (batch2, width2)
    assert jnp.allclose(out2, ref2_bf16, atol=2e-3, rtol=2e-3), \
        "config2 mismatch vs bf16 reference"

    print("KERNEL_OK")
</pallas_src>

<mosaic_0001>
module attributes {stable_mosaic.version = 11 : i64} {
  func.func @_highway_kernel(%arg0: i32, %arg1: i32, %arg2: memref<8x128xf32, #tpu.memory_space<vmem>>, %arg3: memref<1x128x256xbf16, #tpu.memory_space<vmem>>, %arg4: memref<1x4x128xf32, #tpu.memory_space<vmem>>, %arg5: memref<8x128xf32, #tpu.memory_space<vmem>>, %arg6: memref<8x128xf32, #tpu.memory_space<vmem>>) attributes {dimension_semantics = [#tpu.dimension_semantics<parallel>, #tpu.dimension_semantics<arbitrary>], iteration_bounds = array<i64: 1, 3>, scalar_prefetch = 0 : i64, scratch_operands = 1 : i64, tpu.core_type = #tpu.core_type<tc>, window_params = [{transform_indices = @transform_0, window_bounds = array<i64: 8, 128>}, {transform_indices = @transform_1, window_bounds = array<i64: 1, 128, 256>}, {transform_indices = @transform_2, window_bounds = array<i64: 1, 4, 128>}, {transform_indices = @transform_3, window_bounds = array<i64: 8, 128>}]} {
    %c0_i32 = arith.constant 0 : i32
    %0 = arith.cmpi eq, %arg1, %c0_i32 : i32
    %1 = arith.extui %0 : i1 to i32
    %c0_i32_0 = arith.constant 0 : i32
    %2 = arith.cmpi ne, %1, %c0_i32_0 : i32
    scf.if %2 {
      %c0_18 = arith.constant 0 : index
      %c0_19 = arith.constant 0 : index
      %61 = vector.load %arg2[%c0_18, %c0_19] : memref<8x128xf32, #tpu.memory_space<vmem>>, vector<8x128xf32>
      %c0_20 = arith.constant 0 : index
      %c0_21 = arith.constant 0 : index
      %62 = vector.load %arg6[%c0_20, %c0_21] : memref<8x128xf32, #tpu.memory_space<vmem>>, vector<8x128xf32>
      tpu.vector_store %arg6[%c0_20, %c0_21], %61 {strides = array<i32>} : memref<8x128xf32, #tpu.memory_space<vmem>>, vector<8x128xf32>,
    } else {
    }
    %c0 = arith.constant 0 : index
    %c0_1 = arith.constant 0 : index
    %3 = vector.load %arg6[%c0, %c0_1] : memref<8x128xf32, #tpu.memory_space<vmem>>, vector<8x128xf32>
    %c0_2 = arith.constant 0 : index
    %c0_3 = arith.constant 0 : index
    %c0_4 = arith.constant 0 : index
    %4 = vector.load %arg3[%c0_2, %c0_3, %c0_4] : memref<1x128x256xbf16, #tpu.memory_space<vmem>>, vector<1x128x256xbf16>
    %5 = vector.shape_cast %4 : vector<1x128x256xbf16> to vector<128x256xbf16>
    %c0_5 = arith.constant 0 : index
    %c0_6 = arith.constant 0 : index
    %c0_7 = arith.constant 0 : index
    %6 = vector.load %arg4[%c0_5, %c0_6, %c0_7] : memref<1x4x128xf32, #tpu.memory_space<vmem>>, vector<1x4x128xf32>
    %7 = vector.shape_cast %6 : vector<1x4x128xf32> to vector<4x128xf32>
    %8 = vector.extract_strided_slice %7 {offsets = [0, 0], sizes = [1, 128], strides = [1, 1]} : vector<4x128xf32> to vector<1x128xf32>
    %9 = vector.extract_strided_slice %7 {offsets = [1, 0], sizes = [1, 128], strides = [1, 1]} : vector<4x128xf32> to vector<1x128xf32>
    %10 = vector.extract_strided_slice %7 {offsets = [2, 0], sizes = [1, 128], strides = [1, 1]} : vector<4x128xf32> to vector<1x128xf32>
    %11 = vector.extract_strided_slice %7 {offsets = [3, 0], sizes = [1, 128], strides = [1, 1]} : vector<4x128xf32> to vector<1x128xf32>
    %12 = arith.truncf %3 : vector<8x128xf32> to vector<8x128xbf16>
    %cst = arith.constant dense<0.000000e+00> : vector<8x256xf32>
    %13 = tpu.matmul %12, %5, %cst {dimension_numbers = #tpu.dot_dimension_numbers<[1], [0], [0], [1], [0, 0, 1, 1], [], []>} : vector<8x128xbf16>, vector<128x256xbf16>, vector<8x256xf32> -> vector<8x256xf32>
    %14 = vector.extract_strided_slice %13 {offsets = [0, 0], sizes = [8, 128], strides = [1, 1]} : vector<8x256xf32> to vector<8x128xf32>
    %15 = vector.broadcast %8 : vector<1x128xf32> to vector<8x128xf32>
    %16 = arith.addf %14, %15 : vector<8x128xf32>
    %17 = arith.negf %16 : vector<8x128xf32>
    %18 = math.exp %17 : vector<8x128xf32>
    %cst_8 = arith.constant 1.000000e+00 : f32
    %19 = vector.broadcast %cst_8 : f32 to vector<8x128xf32>
    %20 = arith.addf %19, %18 : vector<8x128xf32>
    %21 = arith.divf %19, %20 : vector<8x128xf32>
    %22 = vector.extract_strided_slice %13 {offsets = [0, 128], sizes = [8, 128], strides = [1, 1]} : vector<8x256xf32> to vector<8x128xf32>
    %23 = vector.broadcast %9 : vector<1x128xf32> to vector<8x128xf32>
    %24 = arith.addf %22, %23 : vector<8x128xf32>
    %cst_9 = arith.constant 0.000000e+00 : f32
    %25 = vector.broadcast %cst_9 : f32 to vector<8x128xf32>
    %26 = arith.maximumf %24, %25 : vector<8x128xf32>
    %27 = arith.subf %26, %3 : vector<8x128xf32>
    %28 = arith.mulf %21, %27 : vector<8x128xf32>
    %29 = arith.addf %3, %28 : vector<8x128xf32>
    %cst_10 = arith.constant dense<0.000000e+00> : vector<8xf32>
    %30 = vector.multi_reduction <add>, %29, %cst_10 [1] : vector<8x128xf32> to vector<8xf32>
    %31 = vector.shape_cast %30 : vector<8xf32> to vector<8x1xf32>
    %cst_11 = arith.constant 3.125000e-02 : f32
    %32 = vector.broadcast %cst_11 : f32 to vector<8x1xf32>
    %33 = arith.mulf %31, %32 : vector<8x1xf32>
    %34 = vector.broadcast %33 : vector<8x1xf32> to vector<8x128xf32>
    %35 = arith.subf %29, %34 : vector<8x128xf32>
    %36 = tpu.iota {dimensions = array<i32: 1>} : vector<1x128xi32>
    %c32_i32 = arith.constant 32 : i32
    %37 = vector.broadcast %c32_i32 : i32 to vector<1x128xi32>
    %38 = arith.cmpi slt, %36, %37 : vector<1x128xi32>
    %39 = arith.extui %38 : vector<1x128xi1> to vector<1x128xi32>
    %40 = arith.sitofp %39 : vector<1x128xi32> to vector<1x128xf32>
    %41 = vector.broadcast %40 : vector<1x128xf32> to vector<8x128xf32>
    %42 = arith.mulf %35, %41 : vector<8x128xf32>
    %43 = arith.mulf %42, %42 : vector<8x128xf32>
    %cst_12 = arith.constant dense<0.000000e+00> : vector<8xf32>
    %44 = vector.multi_reduction <add>, %43, %cst_12 [1] : vector<8x128xf32> to vector<8xf32>
    %45 = vector.shape_cast %44 : vector<8xf32> to vector<8x1xf32>
    %cst_13 = arith.constant 3.125000e-02 : f32
    %46 = vector.broadcast %cst_13 : f32 to vector<8x1xf32>
    %47 = arith.mulf %45, %46 : vector<8x1xf32>
    %cst_14 = arith.constant 9.99999996E-13 : f32
    %48 = vector.broadcast %cst_14 : f32 to vector<8x1xf32>
    %49 = arith.addf %47, %48 : vector<8x1xf32>
    %50 = math.rsqrt %49 : vector<8x1xf32>
    %51 = vector.broadcast %50 : vector<8x1xf32> to vector<8x128xf32>
    %52 = arith.mulf %35, %51 : vector<8x128xf32>
    %53 = vector.broadcast %10 : vector<1x128xf32> to vector<8x128xf32>
    %54 = arith.mulf %52, %53 : vector<8x128xf32>
    %55 = vector.broadcast %11 : vector<1x128xf32> to vector<8x128xf32>
    %56 = arith.addf %54, %55 : vector<8x128xf32>
    %c0_15 = arith.constant 0 : index
    %c0_16 = arith.constant 0 : index
    %57 = vector.load %arg6[%c0_15, %c0_16] : memref<8x128xf32, #tpu.memory_space<vmem>>, vector<8x128xf32>
    tpu.vector_store %arg6[%c0_15, %c0_16], %56 {strides = array<i32>} : memref<8x128xf32, #tpu.memory_space<vmem>>, vector<8x128xf32>,
    %c2_i32 = arith.constant 2 : i32
    %58 = arith.cmpi eq, %arg1, %c2_i32 : i32
    %59 = arith.extui %58 : i1 to i32
    %c0_i32_17 = arith.constant 0 : i32
    %60 = arith.cmpi ne, %59, %c0_i32_17 : i32
    scf.if %60 {
      %c0_18 = arith.constant 0 : index
      %c0_19 = arith.constant 0 : index
      %61 = vector.load %arg5[%c0_18, %c0_19] : memref<8x128xf32, #tpu.memory_space<vmem>>, vector<8x128xf32>
      tpu.vector_store %arg5[%c0_18, %c0_19], %56 {strides = array<i32>} : memref<8x128xf32, #tpu.memory_space<vmem>>, vector<8x128xf32>,
    } else {
    }
    return
  }
  func.func @transform_0(%arg0: i32, %arg1: i32) -> (i32, i32) {
    %c0_i32 = arith.constant 0 : i32
    %c0_i32_0 = arith.constant 0 : i32
    return %arg0, %c0_i32 : i32, i32
  }
  func.func @transform_1(%arg0: i32, %arg1: i32) -> (i32, i32, i32) {
    %c0_i32 = arith.constant 0 : i32
    %c0_i32_0 = arith.constant 0 : i32
    %c0_i32_1 = arith.constant 0 : i32
    return %arg1, %c0_i32, %c0_i32_0 : i32, i32, i32
  }
  func.func @transform_2(%arg0: i32, %arg1: i32) -> (i32, i32, i32) {
    %c0_i32 = arith.constant 0 : i32
    %c0_i32_0 = arith.constant 0 : i32
    %c0_i32_1 = arith.constant 0 : i32
    return %arg1, %c0_i32, %c0_i32_0 : i32, i32, i32
  }
  func.func @transform_3(%arg0: i32, %arg1: i32) -> (i32, i32) {
    %c0_i32 = arith.constant 0 : i32
    %c0_i32_0 = arith.constant 0 : i32
    return %arg0, %c0_i32 : i32, i32
  }
}

</mosaic_0001>

<llo_original>
// kernel: tpu_custom_call.1
$region0: #{tpu_custom_call.1}
  #allocation0 [shape = 'u32[]', space=smem, size = 0x4, offset = 0x4, fixed_abs, tag = 'smem constant byte address 0x4 - core index']
  #allocation1 [shape = 'u32[144,128]{1,0:T(1,128)}', space=vmem, size = 0x12000, scoped, tag = 'internal scratch']
  #allocation2 [shape = 'f32[8,128]{1,0:T(8,128)}', space=vmem, size = 0x1000, scoped, tag = 'scratch operand']
  %s0 = inlined_call_operand.hbm [shape: f32[8,128], index: 0, kind: input, shape index: {}]
  %s1 = inlined_call_operand.hbm [shape: bf16[3,128,256], index: 1, kind: input, shape index: {}]
  %s2 = inlined_call_operand.hbm [shape: f32[3,4,128], index: 2, kind: input, shape index: {}]
  %s3 = inlined_call_operand.hbm [shape: f32[8,128], index: 3, kind: output, shape index: {}]
  %s4 = sld [smem:[#allocation0]]
  $region65: #{tpu_custom_call.1} parent=0
    _
  %s6 = ssub.s32 1, %s4
  %s7 = scalar_select 0, %s6, %s4
  $region1: #{tpu_custom_call.1} parent=0
    #allocation3 [shape = 'u8[4096]{0}', space=vmem, size = 0x1000, scoped, tag = 'input window, operand 0, single buffered']
    #allocation4 [shape = 's32[2]{0}', space=sflag, size = 0x8, scoped, tag = 'scoped memory for tpu_custom_call.1']
    #allocation5 [shape = 's32[2]{0}', space=sflag, size = 0x8, scoped, tag = 'scoped memory for tpu_custom_call.1']
    #allocation6 [shape = 'u8[131072]{0}', space=vmem, size = 0x20000, scoped, tag = 'input window, operand 1']
    #allocation7 [shape = 's32[2]{0}', space=sflag, size = 0x8, scoped, tag = 'scoped memory for tpu_custom_call.1']
    #allocation8 [shape = 'u8[4096]{0}', space=vmem, size = 0x1000, scoped, tag = 'input window, operand 2']
    #allocation9 [shape = 'u8[4096]{0}', space=vmem, size = 0x1000, scoped, tag = 'output window, operand 0, single buffered']
    %8 = vsyncpa [#allocation4], 0
    %9 = vsyncpa [#allocation7], 0
    %s10 = scalar_lea.sflag [#allocation7], 1
    %11 = vsyncpa %s10, 0
    %12 = vsyncpa [#allocation5], 0
    loop: start=0, step=1, limit=5
    $region2: #{tpu_custom_call.1} parent=1 // loop_pre_header
      _
    $region3: #{tpu_custom_call.1} parent=1 // loop_header
      %s14 = sphi 0, %s18
      %p15 = scmp.ge.s32.totalorder %s14, 5
      %s21 = sphi 0, %s33
      %s22 = sphi 0, %s29
      %s23 = sphi 0, %s21
      %s24 = sphi 0, %s22
      %s25 = sphi 0, %s23
      %s26 = sphi 0, %s24
      %s36 = sphi 0, %s38
      %s39 = sphi 0, %s36
      %s40 = sphi 0, %s39
      %s56 = sphi 0, %s40
      %s62 = sphi 0, %s64
      %s65 = sphi 0, %s62
      %s66 = sphi 0, %s65
      %s82 = sphi 0, %s66
      %s88 = sphi 0, %s90
      %s91 = sphi 0, %s88
      %s92 = sphi 0, %s91
      %s108 = sphi 0, %s92
      %s114 = sphi 0, %s116
      %s117 = sphi 0, %s114
      %s118 = sphi 0, %s117
      %s134 = sphi 0, %s118
    $region4: #{tpu_custom_call.1} parent=1 // loop_header_branch
      %17 = sbr.rel (%p15) target = $region8
    $region5: #{tpu_custom_call.1} parent=1 // loop_body
      %s19 = ssub.s32 %s14, 1
      %s20 = ssub.s32 %s14, 2
      %s27 = sadd.s32 1, %s22
      %p28 = scmp.ge.s32.totalorder %s27, 3
      %s29 = scalar_select %p28, 0, %s27
      %s30 = sadd.s32 1, %s21
      %s31 = scalar_select %p28, %s30, %s21
      %p32 = scmp.ge.s32.totalorder %s31, 1
      %s33 = scalar_select %p32, 0, %s31
      %s34 = ssub.s32 %s21, %s33
      %p35 = scmp.eq.s32.totalorder %s34, 0
      %s37 = sadd.s32 %s36, 1
      %s38 = scalar_select %p35, %s36, %s37
      %p41 = pneg %p35
      %p42 = scmp.eq.s32.totalorder %s14, 2
      %p43 = por %p41, %p42
      %p44 = scmp.ne.s32.totalorder %s36, %s39
      %p45 = scmp.eq.s32.totalorder %s14, 0
      %p46 = por %p44, %p45
      %p47 = scmp.ne.s32.totalorder %s36, %s39
      %p48 = scmp.eq.s32.totalorder %s19, 2
      %p49 = por %p47, %p48
      %p50 = scmp.ne.s32.totalorder %s39, %s40
      %p51 = scmp.eq.s32.totalorder %s19, 0
      %p52 = por %p50, %p51
      %p53 = scmp.ne.s32.totalorder %s39, %s40
      %p54 = scmp.eq.s32.totalorder %s20, 2
      %p55 = por %p53, %p54
      %p57 = scmp.ne.s32.totalorder %s40, %s56
      %p58 = scmp.eq.s32.totalorder %s20, 0
      %p59 = por %p57, %p58
      %s60 = ssub.s32 %s22, %s29
      %p61 = scmp.eq.s32.totalorder %s60, 0
      %s63 = sadd.s32 %s62, 1
      %s64 = scalar_select %p61, %s62, %s63
      %p67 = pneg %p61
      %p68 = scmp.eq.s32.totalorder %s14, 2
      %p69 = por %p67, %p68
      %p70 = scmp.ne.s32.totalorder %s62, %s65
      %p71 = scmp.eq.s32.totalorder %s14, 0
      %p72 = por %p70, %p71
      %p73 = scmp.ne.s32.totalorder %s62, %s65
      %p74 = scmp.eq.s32.totalorder %s19, 2
      %p75 = por %p73, %p74
      %p76 = scmp.ne.s32.totalorder %s65, %s66
      %p77 = scmp.eq.s32.totalorder %s19, 0
      %p78 = por %p76, %p77
      %p79 = scmp.ne.s32.totalorder %s65, %s66
      %p80 = scmp.eq.s32.totalorder %s20, 2
      %p81 = por %p79, %p80
      %p83 = scmp.ne.s32.totalorder %s66, %s82
      %p84 = scmp.eq.s32.totalorder %s20, 0
      %p85 = por %p83, %p84
      %s86 = ssub.s32 %s22, %s29
      %p87 = scmp.eq.s32.totalorder %s86, 0
      %s89 = sadd.s32 %s88, 1
      %s90 = scalar_select %p87, %s88, %s89
      %p93 = pneg %p87
      %p94 = scmp.eq.s32.totalorder %s14, 2
      %p95 = por %p93, %p94
      %p96 = scmp.ne.s32.totalorder %s88, %s91
      %p97 = scmp.eq.s32.totalorder %s14, 0
      %p98 = por %p96, %p97
      %p99 = scmp.ne.s32.totalorder %s88, %s91
      %p100 = scmp.eq.s32.totalorder %s19, 2
      %p101 = por %p99, %p100
      %p102 = scmp.ne.s32.totalorder %s91, %s92
      %p103 = scmp.eq.s32.totalorder %s19, 0
      %p104 = por %p102, %p103
      %p105 = scmp.ne.s32.totalorder %s91, %s92
      %p106 = scmp.eq.s32.totalorder %s20, 2
      %p107 = por %p105, %p106
      %p109 = scmp.ne.s32.totalorder %s92, %s108
      %p110 = scmp.eq.s32.totalorder %s20, 0
      %p111 = por %p109, %p110
      %s112 = ssub.s32 %s21, %s33
      %p113 = scmp.eq.s32.totalorder %s112, 0
      %s115 = sadd.s32 %s114, 1
      %s116 = scalar_select %p113, %s114, %s115
      %p119 = pneg %p113
      %p120 = scmp.eq.s32.totalorder %s14, 2
      %p121 = por %p119, %p120
      %p122 = scmp.ne.s32.totalorder %s114, %s117
      %p123 = scmp.eq.s32.totalorder %s14, 0
      %p124 = por %p122, %p123
      %p125 = scmp.ne.s32.totalorder %s114, %s117
      %p126 = scmp.eq.s32.totalorder %s19, 2
      %p127 = por %p125, %p126
      %p128 = scmp.ne.s32.totalorder %s117, %s118
      %p129 = scmp.eq.s32.totalorder %s19, 0
      %p130 = por %p128, %p129
      %p131 = scmp.ne.s32.totalorder %s117, %s118
      %p132 = scmp.eq.s32.totalorder %s20, 2
      %p133 = por %p131, %p132
      %p135 = scmp.ne.s32.totalorder %s118, %s134
      %p136 = scmp.eq.s32.totalorder %s20, 0
      %p137 = por %p135, %p136
      %p138 = scmp.le.s32.totalorder 1, %s14
      %p139 = scmp.lt.s32.totalorder %s14, 4
      %p140 = pnand %p138, %p139
      %p141 = pneg %p140
      // Predicated region
      $region9: #{tpu_custom_call.1} parent=5 // pred_check
        _
      $region10: #{tpu_custom_call.1} parent=5 // pred_check_branch
        %143 = sbr.rel (%p140) target = $region12
      $region11: #{tpu_custom_call.1} parent=5 // pred_region
        %s144 = ssub.s32 %s14, 1
        // Predicated region
        $region13: #{tpu_custom_call.1} parent=11 // pred_check
          %p145 = pneg %p52
        $region14: #{tpu_custom_call.1} parent=11 // pred_check_branch
          %147 = sbr.rel (%p145) target = $region16
        $region15: #{tpu_custom_call.1} parent=11 // pred_region
          %s149 = ssub.s32 128, 128
          %150 = vsyncadd [#allocation4], %s149
          %s151 = smul.addr %s23, 128
          %s152 = scalar_lea.hbm %s0, %s151
          %s154 = sshll.u32 [#allocation3], 4
          %s155 = int_to_ptr.vmem [resolvable:$true] %s154
          %157 = dma.hbm_to_vmem [thread:$0]  %s152, 128, %s155, [#allocation4]
        $region16: #{tpu_custom_call.1} parent=11 // pred_fallthru
          _
      $region12: #{tpu_custom_call.1} parent=5 // pred_fallthru
        _
      %p158 = scmp.lt.s32.totalorder %s14, 3
      // Predicated region
      $region17: #{tpu_custom_call.1} parent=5 // pred_check
        %p159 = pneg %p158
      $region18: #{tpu_custom_call.1} parent=5 // pred_check_branch
        %161 = sbr.rel (%p159) target = $region20
      $region19: #{tpu_custom_call.1} parent=5 // pred_region
        // Predicated region
        $region21: #{tpu_custom_call.1} parent=19 // pred_check
          %p162 = pneg %p72
        $region22: #{tpu_custom_call.1} parent=19 // pred_check_branch
          %164 = sbr.rel (%p162) target = $region24
        $region23: #{tpu_custom_call.1} parent=19 // pred_region
          %s165 = sand.u32 %s14, 1
          %s166 = scalar_lea.sflag [#allocation7], %s165
          %s167 = sand.u32 %s62, 1
          %s168 = smul.addr %s167, 128
          %s169 = scalar_lea.vmem [#allocation6], %s168
          %s171 = ssub.s32 2048, 2048
          %172 = vsyncadd %s166, %s171
          %s173 = smul.addr %s22, 32
          %s174 = smul.addr %s173, 64
          %s175 = scalar_lea.hbm %s1, %s174
          %s176 = sshll.u32 %s169, 4
          %s177 = int_to_ptr.vmem [resolvable:$true] %s176
          %182 = dma.hbm_to_vmem [thread:$0]  %s175, 2048, %s177, %s166, 128, 128, 8
        $region24: #{tpu_custom_call.1} parent=19 // pred_fallthru
          _
        // Predicated region
        $region25: #{tpu_custom_call.1} parent=19 // pred_check
          %p183 = pneg %p98
        $region26: #{tpu_custom_call.1} parent=19 // pred_check_branch
          %185 = sbr.rel (%p183) target = $region28
        $region27: #{tpu_custom_call.1} parent=19 // pred_region
          %s186 = sand.u32 %s14, 1
          %s187 = scalar_lea.sflag [#allocation7], %s186
          %s188 = sand.u32 %s88, 1
          %s189 = smul.addr %s188, 4
          %s190 = scalar_lea.vmem [#allocation8], %s189
          %s192 = ssub.s32 64, 64
          %193 = vsyncadd %s187, %s192
          %s194 = smul.addr %s22, 64
          %s195 = scalar_lea.hbm %s2, %s194
          %s197 = sshll.u32 %s190, 4
          %s198 = int_to_ptr.vmem [resolvable:$true] %s197
          %200 = dma.hbm_to_vmem [thread:$0]  %s195, 64, %s198, %s187
        $region28: #{tpu_custom_call.1} parent=19 // pred_fallthru
          _
      $region20: #{tpu_custom_call.1} parent=5 // pred_fallthru
        _
      %p201 = scmp.le.s32.totalorder 1, %s14
      %p202 = scmp.lt.s32.totalorder %s14, 4
      %p203 = pnand %p201, %p202
      %p204 = pneg %p203
      // Predicated region
      $region29: #{tpu_custom_call.1} parent=5 // pred_check
        _
      $region30: #{tpu_custom_call.1} parent=5 // pred_check_branch
        %206 = sbr.rel (%p203) target = $region32
      $region31: #{tpu_custom_call.1} parent=5 // pred_region
        %s207 = ssub.s32 %s14, 1
        // Predicated region
        $region33: #{tpu_custom_call.1} parent=31 // pred_check
          %p208 = pneg %p52
        $region34: #{tpu_custom_call.1} parent=31 // pred_check_branch
          %210 = sbr.rel (%p208) target = $region36
        $region35: #{tpu_custom_call.1} parent=31 // pred_region
          %211 = dma.done [#allocation4], 128
        $region36: #{tpu_custom_call.1} parent=31 // pred_fallthru
          _
        %s212 = sand.u32 %s19, 1
        %s213 = scalar_lea.sflag [#allocation7], %s212
        %s214 = sand.u32 %s65, 1
        %s215 = smul.addr %s214, 128
        %s216 = scalar_lea.vmem [#allocation6], %s215
        // Predicated region
        $region37: #{tpu_custom_call.1} parent=31 // pred_check
          %p217 = pneg %p78
        $region38: #{tpu_custom_call.1} parent=31 // pred_check_branch
          %219 = sbr.rel (%p217) target = $region40
        $region39: #{tpu_custom_call.1} parent=31 // pred_region
          %220 = dma.done %s213, 2048
        $region40: #{tpu_custom_call.1} parent=31 // pred_fallthru
          _
        %s221 = sand.u32 %s19, 1
        %s222 = scalar_lea.sflag [#allocation7], %s221
        %s223 = sand.u32 %s91, 1
        %s224 = smul.addr %s223, 4
        %s225 = scalar_lea.vmem [#allocation8], %s224
        // Predicated region
        $region41: #{tpu_custom_call.1} parent=31 // pred_check
          %p226 = pneg %p104
        $region42: #{tpu_custom_call.1} parent=31 // pred_check_branch
          %228 = sbr.rel (%p226) target = $region44
        $region43: #{tpu_custom_call.1} parent=31 // pred_region
          %229 = dma.done %s222, 64
        $region44: #{tpu_custom_call.1} parent=31 // pred_fallthru
          _
        %p230 = pneg %p52
        %p231 = pneg %p49
        %s232 = sand.u32 %s19, 1
        %s233 = scalar_lea.sflag [#allocation7], %s232
        %s234 = sand.u32 %s65, 1
        %s235 = smul.addr %s234, 128
        %s236 = scalar_lea.vmem [#allocation6], %s235
        %p237 = pneg %p78
        %p238 = pneg %p75
        %s239 = sand.u32 %s19, 1
        %s240 = scalar_lea.sflag [#allocation7], %s239
        %s241 = sand.u32 %s91, 1
        %s242 = smul.addr %s241, 4
        %s243 = scalar_lea.vmem [#allocation8], %s242
        %p244 = pneg %p104
        %p245 = pneg %p101
        %p246 = pneg %p130
        %p247 = pneg %p127
        %p249 = scmp.eq.s32.totalorder %s24, 0
        // Predicated region
        $region45: #{tpu_custom_call.1} parent=31 // pred_check
          %p250 = pneg %p249
        $region46: #{tpu_custom_call.1} parent=31 // pred_check_branch
          %252 = sbr.rel (%p250) target = $region48
        $region47: #{tpu_custom_call.1} parent=31 // pred_region
          %v253 = vld [vmem:[#allocation3] sm:$0xff]
          %254 = vst [vmem:[#allocation2] sm:$0xff] %v253
        $region48: #{tpu_custom_call.1} parent=31 // pred_fallthru
          _
        %v255 = vld [vmem:[#allocation2] sm:$0xff]
        %v256 = vld [vmem:[%s216] sm:$0xff]
        %v257 = vld [vmem:[%s216 + $0x8] sm:$0xff]
        %v258 = vld [vmem:[%s216 + $0x10] sm:$0xff]
        %v259 = vld [vmem:[%s216 + $0x18] sm:$0xff]
        %v260 = vld [vmem:[%s216 + $0x20] sm:$0xff]
        %v261 = vld [vmem:[%s216 + $0x28] sm:$0xff]
        %v262 = vld [vmem:[%s216 + $0x30] sm:$0xff]
        %v263 = vld [vmem:[%s216 + $0x38] sm:$0xff]
        %v264 = vld [vmem:[%s216 + $0x40] sm:$0xff]
        %v265 = vld [vmem:[%s216 + $0x48] sm:$0xff]
        %v266 = vld [vmem:[%s216 + $0x50] sm:$0xff]
        %v267 = vld [vmem:[%s216 + $0x58] sm:$0xff]
        %v268 = vld [vmem:[%s216 + $0x60] sm:$0xff]
        %v269 = vld [vmem:[%s216 + $0x68] sm:$0xff]
        %v270 = vld [vmem:[%s216 + $0x70] sm:$0xff]
        %v271 = vld [vmem:[%s216 + $0x78] sm:$0xff]
        %v272 = vld [vmem:[%s225] sm:$0xf]
        %v273 = vpack.c.bf16 %v255, %v255
        %v290 = vunpack.c.l.b16 %v256
        %v291 = vunpack.c.h.b16 %v256
        %v292 = vunpack.c.l.b16 %v257
        %v293 = vunpack.c.h.b16 %v257
        %v294 = vunpack.c.l.b16 %v258
        %v295 = vunpack.c.h.b16 %v258
        %v296 = vunpack.c.l.b16 %v259
        %v297 = vunpack.c.h.b16 %v259
        %v298 = vunpack.c.l.b16 %v260
        %v299 = vunpack.c.h.b16 %v260
        %v300 = vunpack.c.l.b16 %v261
        %v301 = vunpack.c.h.b16 %v261
        %v302 = vunpack.c.l.b16 %v262
        %v303 = vunpack.c.h.b16 %v262
        %v304 = vunpack.c.l.b16 %v263
        %v305 = vunpack.c.h.b16 %v263
        %v306 = vunpack.c.l.b16 %v264
        %v307 = vunpack.c.h.b16 %v264
        %v308 = vunpack.c.l.b16 %v265
        %v309 = vunpack.c.h.b16 %v265
        %v310 = vunpack.c.l.b16 %v266
        %v311 = vunpack.c.h.b16 %v266
        %v312 = vunpack.c.l.b16 %v267
        %v313 = vunpack.c.h.b16 %v267
        %v314 = vunpack.c.l.b16 %v268
        %v315 = vunpack.c.h.b16 %v268
        %v316 = vunpack.c.l.b16 %v269
        %v317 = vunpack.c.h.b16 %v269
        %v318 = vunpack.c.l.b16 %v270
        %v319 = vunpack.c.h.b16 %v270
        %v320 = vunpack.c.l.b16 %v271
        %v321 = vunpack.c.h.b16 %v271
        %v322 = vpack.c.b16 %v292, %v290
        %v323 = vpack.c.b16 %v293, %v291
        %v324 = vpack.c.b16 %v296, %v294
        %v325 = vpack.c.b16 %v297, %v295
        %v326 = vpack.c.b16 %v300, %v298
        %v327 = vpack.c.b16 %v301, %v299
        %v328 = vpack.c.b16 %v304, %v302
        %v329 = vpack.c.b16 %v305, %v303
        %v330 = vpack.c.b16 %v308, %v306
        %v331 = vpack.c.b16 %v309, %v307
        %v332 = vpack.c.b16 %v312, %v310
        %v333 = vpack.c.b16 %v313, %v311
        %v334 = vpack.c.b16 %v316, %v314
        %v335 = vpack.c.b16 %v317, %v315
        %v336 = vpack.c.b16 %v320, %v318
        %v337 = vpack.c.b16 %v321, %v319
        %354 = vmatprep.subr.bf16.mxu0 %v323
        %355 = vmatpush1.bf16.msra.mxu0 %v322
        %356 = vmatprep.subr.bf16.mxu0 %v325
        %357 = vmatpush1.bf16.msra.mxu0 %v324
        %358 = vmatprep.subr.bf16.mxu0 %v327
        %359 = vmatpush1.bf16.msra.mxu0 %v326
        %360 = vmatprep.subr.bf16.mxu0 %v329
        %361 = vmatpush1.bf16.msra.mxu0 %v328
        %362 = vmatprep.subr.bf16.mxu0 %v331
        %363 = vmatpush1.bf16.msra.mxu0 %v330
        %364 = vmatprep.subr.bf16.mxu0 %v333
        %365 = vmatpush1.bf16.msra.mxu0 %v332
        %366 = vmatprep.subr.bf16.mxu0 %v335
        %367 = vmatpush1.bf16.msra.mxu0 %v334
        %368 = vmatprep.subr.bf16.mxu0 %v337
        %369 = vmatpush1.bf16.msra.mxu0 %v336
        %370 = vmatprep.subr.bf16.mxu0 0
        %371 = vmatpush1.bf16.msra.mxu0 0
        %372 = vmatprep.subr.bf16.mxu0 0
        %373 = vmatpush1.bf16.msra.mxu0 0
        %374 = vmatprep.subr.bf16.mxu0 0
        %375 = vmatpush1.bf16.msra.mxu0 0
        %376 = vmatprep.subr.bf16.mxu0 0
        %377 = vmatpush1.bf16.msra.mxu0 0
        %378 = vmatprep.subr.bf16.mxu0 0
        %379 = vmatpush1.bf16.msra.mxu0 0
        %380 = vmatprep.subr.bf16.mxu0 0
        %381 = vmatpush1.bf16.msra.mxu0 0
        %382 = vmatprep.subr.bf16.mxu0 0
        %383 = vmatpush1.bf16.msra.mxu0 0
        %384 = vmatprep.subr.bf16.mxu0 0
        %385 = vmatpush1.bf16.msra.mxu0 0
        %386 = vmatprep.mubr.bf16.mxu0 0
        %387 = vmatmul.mubr.bf16.gmra.mrb[0].mxu0 %v273
        %v388 = vpop.f32.mrb[0].mxu0
        %v389 = vadd.f32 0.0, %v388
        %v390 = vpop.f32.mrb[0].mxu0
        %v391 = vadd.f32 0.0, %v390
        %v392 = vpop.f32.mrb[0].mxu0
        %v393 = vpop.f32.mrb[0].mxu0
        %394 = vdwg.mxu0
        %v395 = vlaneseq
        %v396 = vshrl.u32 %v395, 7
        %v397 = vsub.s32 0, %v396
        %v398 = vrot.slane %v272, %v397
        %v399 = vadd.f32 %v389, %v398
        %v400 = vxor.u32 %v399, 2147483648
        %v401 = vmul.f32 %v400, 1.442695
        %v402 = vpow.pop %v401
        %v403 = vadd.f32 %v402, 1.0
        %v404 = vrcp.pop %v403
        %v405 = vmul.f32 1.0, %v404
        %v406 = vlaneseq
        %v407 = vshrl.u32 %v406, 7
        %v408 = vsub.s32 1, %v407
        %v409 = vrot.slane %v272, %v408
        %v410 = vadd.f32 %v391, %v409
        %v411 = vmax.f32 %v410, 0.0
        %v412 = vsub.f32 %v411, %v255
        %v413 = vmul.f32 %v405, %v412
        %v414 = vadd.f32 %v255, %v413
        %415 = vadd.xlane.f32.xlu0 %v414
        %v416 = vpop.xlane.xlu0 %415
        %v417 = vmul.f32 %v416, 0.03125
        %v418 = vsub.f32 %v414, %v417
        %v419 = vlaneseq
        %v420 = vand.u32 %v419, 127
        %vm421 = vcmp.lt.s32.totalorder %v420, 32
        %v422 = vsel %vm421, 1, 0
        %v423 = vcvt.s32.f32 %v422
        %v424 = vmul.f32 %v418, %v423
        %v425 = vmul.f32 %v424, %v424
        %426 = vadd.xlane.f32.xlu0 %v425
        %v427 = vpop.xlane.xlu0 %426
        %v428 = vmul.f32 %v427, 0.03125
        %v429 = vadd.f32 %v428, 1e-12
        %v430 = vrsqrt.pop %v429
        %v431 = vmul.f32 %v418, %v430
        %v432 = vlaneseq
        %v433 = vshrl.u32 %v432, 7
        %v434 = vsub.s32 2, %v433
        %v435 = vrot.slane %v272, %v434
        %v436 = vmul.f32 %v431, %v435
        %v437 = vlaneseq
        %v438 = vshrl.u32 %v437, 7
        %v439 = vsub.s32 3, %v438
        %v440 = vrot.slane %v272, %v439
        %v441 = vadd.f32 %v436, %v440
        %442 = vst [vmem:[#allocation2] sm:$0xff] %v441
        %p443 = scmp.eq.s32.totalorder %s24, 2
        // Predicated region
        $region49: #{tpu_custom_call.1} parent=31 // pred_check
          %p444 = pneg %p443
        $region50: #{tpu_custom_call.1} parent=31 // pred_check_branch
          %446 = sbr.rel (%p444) target = $region52
        $region51: #{tpu_custom_call.1} parent=31 // pred_region
          %447 = vst [vmem:[#allocation9] sm:$0xff] %v441
        $region52: #{tpu_custom_call.1} parent=31 // pred_fallthru
          _
        // Predicated region
        $region53: #{tpu_custom_call.1} parent=31 // pred_check
          %p448 = pneg %p127
        $region54: #{tpu_custom_call.1} parent=31 // pred_check_branch
          %450 = sbr.rel (%p448) target = $region56
        $region55: #{tpu_custom_call.1} parent=31 // pred_region
          %s452 = ssub.s32 128, 128
          %453 = vsyncadd [#allocation5], %s452
          %s454 = smul.addr %s23, 128
          %s455 = scalar_lea.hbm %s3, %s454
          %s457 = sshll.u32 [#allocation9], 4
          %s458 = int_to_ptr.vmem [resolvable:$true] %s457
          %460 = dma.vmem_to_hbm [thread:$0]  %s458, 128, %s455, [#allocation5]
        $region56: #{tpu_custom_call.1} parent=31 // pred_fallthru
          _
        // Predicated region
        $region57: #{tpu_custom_call.1} parent=31 // pred_check
          %p461 = pneg %p127
        $region58: #{tpu_custom_call.1} parent=31 // pred_check_branch
          %463 = sbr.rel (%p461) target = $region60
        $region59: #{tpu_custom_call.1} parent=31 // pred_region
          %464 = dma.done [#allocation5], 128
        $region60: #{tpu_custom_call.1} parent=31 // pred_fallthru
          _
      $region32: #{tpu_custom_call.1} parent=5 // pred_fallthru
        _
      %p465 = scmp.le.s32.totalorder 2, %s14
      // Predicated region
      $region61: #{tpu_custom_call.1} parent=5 // pred_check
        %p466 = pneg %p465
      $region62: #{tpu_custom_call.1} parent=5 // pred_check_branch
        %468 = sbr.rel (%p466) target = $region64
      $region63: #{tpu_custom_call.1} parent=5 // pred_region
        %s469 = ssub.s32 %s14, 2
      $region64: #{tpu_custom_call.1} parent=5 // pred_fallthru
        _
    $region6: #{tpu_custom_call.1} parent=1 // loop_footer
      %s18 = sadd.s32 1, %s14
    $region7: #{tpu_custom_call.1} parent=1 // loop_footer_branch
      %13 = sbr.rel target = $region3
    $region8: #{tpu_custom_call.1} parent=1 // loop_exit
      _
    %470 = vsyncpa [#allocation4], 1
    %s471 = scalar_lea.sflag [#allocation4], 1
    %472 = vsyncpa %s471, 1
    %473 = vsyncpa [#allocation7], 1
    %s474 = scalar_lea.sflag [#allocation7], 1
    %475 = vsyncpa %s474, 1
    %476 = vsyncpa [#allocation5], 1
    %s477 = scalar_lea.sflag [#allocation5], 1
    %478 = vsyncpa %s477, 1

</llo_original>
